<compile_context>
chip_gen: v7x
topology: tpu7x:2x2x1
jax: 0.10.0
libtpu: 0.0.40
codegen_flags: <defaults>
</compile_context>

<pallas_src>
import functools

import numpy as np
import jax
import jax.numpy as jnp
from jax.experimental import pallas as pl
from jax.experimental.pallas import tpu as pltpu

# Scoped-VMEM budget requested from Mosaic.  Safe on v5e/v6e (128 MiB physical)
# and v7x (64 MiB physical); the largest tiling below needs ~20-25 MiB.
_VMEM_LIMIT_BYTES = 32 * 1024 * 1024

# Keep the [K, G] embedding operand fully VMEM-resident when it is this small.
_X_RESIDENT_BYTES = 4 * 1024 * 1024


def _round_up(x, m):
    return ((x + m - 1) // m) * m


def _pick_tile(n, align, cap):
    """Largest tile (multiple of `align`, <= cap) that divides n.

    Returns n itself (a full-extent block is always legal) when n is small and
    misaligned; returns None when n is large and has no aligned divisor -- the
    caller then zero-pads instead of falling back to one giant block."""
    if n <= cap and n % align != 0:
        return n
    t = min(cap, n)
    t -= t % align
    while t >= align:
        if n % t == 0:
            return t
        t -= align
    return None


# --------------------------------------------------------------------------
# Tiled graph-propagation matmul kernel (shared by GroupConv / HyperConv)
# --------------------------------------------------------------------------
def _prop_matmul_kernel(m_ref, x_ref, o_ref, *, tk, x_resident):
    """One (tm, G) output tile of out = M @ X, accumulated over the K grid axis.

    The output block index is constant across K, so the block stays resident in
    VMEM and is accumulated in place (no separate scratch accumulator)."""
    k = pl.program_id(1)

    @pl.when(k == 0)
    def _():
        o_ref[...] = jnp.zeros_like(o_ref)

    if x_resident:
        # X lives whole in VMEM (constant index_map -> fetched once); slice the
        # k-tile locally instead of re-DMAing it for every row tile.
        x = x_ref[pl.ds(pl.multiple_of(k * tk, tk), tk), :]
    else:
        x = x_ref[...]
    # Cast the embedding tile to the operator's streaming dtype in-vreg (free);
    # the f32 intermediate is never re-written to HBM in a narrow dtype.
    o_ref[...] += jnp.dot(m_ref[...], x.astype(m_ref.dtype),
                          preferred_element_type=jnp.float32)


def prop_matmul(M, X):
    """Tiled, auto-pipelined (M @ X) used by the graph propagations.

    M: [N, K] graph operator streamed from HBM in (tm, tk) tiles (the dominant
       HBM traffic; pre-cast it once to bf16 via precast_graph_operators).
    X: [K, G] embedding; kept fully VMEM-resident when small, tiled otherwise.
    Accumulation and the output are always f32.
    """
    N, K = M.shape
    K2, G = X.shape
    assert K == K2

    # Tile search: row tile multiple of 16 (bf16 sublane-packing safe) up to
    # 1024; K tile multiple of 128 (lane dim of the operator block) up to 2048.
    tm = _pick_tile(N, 16, 1024)
    tk = _pick_tile(K, 128, 2048)
    Np = N if tm is not None else _round_up(N, 256)
    Kp = K if tk is not None else _round_up(K, 512)
    tm = tm if tm is not None else 256
    tk = tk if tk is not None else 512
    if Np != N or Kp != K:
        # Awkward production shapes: zero-pad (correct for a matmul) instead of
        # collapsing to one huge block that blows the VMEM budget.
        M = jnp.pad(M, ((0, Np - N), (0, Kp - K)))
    if Kp != K:
        X = jnp.pad(X, ((0, Kp - K), (0, 0)))

    x_resident = Kp * G * X.dtype.itemsize <= _X_RESIDENT_BYTES
    if x_resident:
        x_spec = pl.BlockSpec((Kp, G), lambda i, k: (0, 0))   # fetched once
    else:
        x_spec = pl.BlockSpec((tk, G), lambda i, k: (k, 0))

    out = pl.pallas_call(
        functools.partial(_prop_matmul_kernel, tk=tk, x_resident=x_resident),
        out_shape=jax.ShapeDtypeStruct((Np, G), jnp.float32),
        grid_spec=pltpu.PrefetchScalarGridSpec(
            num_scalar_prefetch=0,
            grid=(Np // tm, Kp // tk),
            in_specs=[pl.BlockSpec((tm, tk), lambda i, k: (i, k)), x_spec],
            out_specs=pl.BlockSpec((tm, G), lambda i, k: (i, 0))),
        compiler_params=pltpu.CompilerParams(
            # Row tiles are independent ("parallel"); the K reduction is last
            # and "arbitrary".  TODO(synk): try pltpu.CORE_PARALLEL on axis 0
            # when targeting v7x (2 TensorCores per chip).
            dimension_semantics=("parallel", "arbitrary"),
            vmem_limit_bytes=_VMEM_LIMIT_BYTES),
    )(M, X)
    return out[:N] if Np != N else out


def group_conv(D, A, emb, n_layers):
    """GroupConv, reassociated: emb_{l+1} = D @ (A @ emb_l); out = sum_l emb_l.

    Never materializes DA = D @ A (avoids the O(N^3) matmul and its NxN buffer).
    """
    acc = emb
    cur = emb
    for _ in range(n_layers):
        cur = prop_matmul(D, prop_matmul(A, cur))
        acc = acc + cur
    return acc


def hyper_conv(adj, emb, n_layers):
    """HyperConv: emb_{l+1} = adj @ emb_l; out = sum_l emb_l (dense adj)."""
    acc = emb
    cur = emb
    for _ in range(n_layers):
        cur = prop_matmul(adj, cur)
        acc = acc + cur
    return acc


def precast_graph_operators(params, dtype=jnp.bfloat16):
    """One-time cast of the NxN graph operators to the streaming dtype.

    Call this ONCE at setup (not per forward): it removes a full f32 read +
    narrow write of each adjacency matrix from every forward call.
    TODO(synk): on v7x use jnp.float8_e4m3fn here (MXU-native); on v6e an int8
    quantization with per-row scales is the equivalent second-tier win."""
    p = dict(params)
    for k in ("D", "A", "adj"):
        p[k] = params[k].astype(dtype)
    return p


# --------------------------------------------------------------------------
# Fused attention + predict branch kernel (eval mode)
# --------------------------------------------------------------------------
def _branch_kernel(set_ref, ctx_ref, pure_ref, item_ref, mask_ref,
                   w1s_ref, w1c_ref, b1_ref, w2t_ref, b2_ref,
                   pw1a_ref, pw1b_ref, pw1c_ref, pb1_ref, pw2t_ref, pb2_ref,
                   y_ref):
    """Scorer MLP -> masked softmax -> attention pooling -> PredictLayer -> sigmoid.

    All intermediates (hidden activations, scores, softmax weights, pooled
    embedding) stay in VMEM/vregs; only the (tb, 1) prediction goes to HBM.
    """
    tb, L, D = set_ref.shape
    w1s = w1s_ref[...]          # (D, H)
    b1 = b1_ref[...]            # (1, H)
    w2t = w2t_ref[...]          # (1, H)
    b2 = b2_ref[...]            # (1, 1)
    mask = mask_ref[...]        # (tb, L)

    # Attention MLP first layer, split instead of concat([set_emb, ctx]):
    #   hidden_l = set_emb[:, l] @ W1[:D] + ctx @ W1[D:] + b1
    # The ctx half is computed once per batch row (not L times) and the
    # (B, L, 2D) concatenated activation is never materialized.
    ctx_h = jnp.dot(ctx_ref[...], w1c_ref[...],
                    preferred_element_type=jnp.float32)           # (tb, H)

    # The member axis L is tiny and static: fully unrolled loop, each step one
    # dense (tb, D) x (D, H) MXU matmul (no broadcast weight copies, no tiny
    # per-row batched matmuls).  Width-1 second layer = VPU mul + lane reduce.
    member_embs = []
    scores = []
    for l in range(L):
        e_l = set_ref[:, l, :]                                    # (tb, D)
        member_embs.append(e_l)
        h_l = jnp.maximum(
            jnp.dot(e_l, w1s, preferred_element_type=jnp.float32) + ctx_h + b1,
            0.0)                                                  # (tb, H)
        s_l = jnp.sum(h_l * w2t, axis=-1, keepdims=True) + b2     # (tb, 1)
        # masked_fill_(-inf): a fully-masked row yields NaN, matching the
        # PyTorch masked_fill + softmax semantics; callers leave >=1 unmasked.
        scores.append(jnp.where(mask[:, l:l + 1] != 0.0, -jnp.inf, s_l))

    # Masked softmax over the member/friend axis, in column form (the (tb, L)
    # score matrix and the attention weights never leave vregs).
    m = scores[0]
    for l in range(1, L):
        m = jnp.maximum(m, scores[l])
    exps = [jnp.exp(s - m) for s in scores]
    denom = exps[0]
    for l in range(1, L):
        denom = denom + exps[l]
    inv = pl.reciprocal(denom, approx=True)   # EUP rcp; ~1e-3 rel err in at_wt

    # Attention-weighted pooling (at_wt is unused downstream in eval mode).
    att = (exps[0] * inv) * member_embs[0]
    for l in range(1, L):
        att = att + (exps[l] * inv) * member_embs[l]              # (tb, D)

    # Combine + PredictLayer + sigmoid.
    comb = att + pure_ref[...]
    item = item_ref[...]
    elem = comb * item
    # The single K=3D GEMM [elem|comb|item] @ W1 expressed as three K=D partial
    # products into one f32 accumulator (minor-dim concat at D=16/32 lanes is
    # not reliably lowered); math is identical.
    h2 = (jnp.dot(elem, pw1a_ref[...], preferred_element_type=jnp.float32)
          + jnp.dot(comb, pw1b_ref[...], preferred_element_type=jnp.float32)
          + jnp.dot(item, pw1c_ref[...], preferred_element_type=jnp.float32)
          + pb1_ref[...])
    h2 = jnp.maximum(h2, 0.0)                                     # (tb, 8)
    y = jnp.sum(h2 * pw2t_ref[...], axis=-1, keepdims=True) + pb2_ref[...]
    y_ref[...] = jax.nn.sigmoid(y)


def fused_branch(set_emb, ctx, pure, item, mask, aw, pw):
    """One pallas_call for the whole attention + predict branch (eval mode)."""
    B, L, D = set_emb.shape
    H = aw["w1"].shape[1]

    # Batch tile up to 512 (per-tile footprint is a few hundred KiB); pad B
    # only when it is large and has no aligned divisor.
    tb = _pick_tile(B, 8, 512)
    Bp = B if tb is not None else _round_up(B, 128)
    tb = tb if tb is not None else 128
    if Bp != B:
        set_emb = jnp.pad(set_emb, ((0, Bp - B), (0, 0), (0, 0)))
        ctx = jnp.pad(ctx, ((0, Bp - B), (0, 0)))
        pure = jnp.pad(pure, ((0, Bp - B), (0, 0)))
        item = jnp.pad(item, ((0, Bp - B), (0, 0)))
        mask = jnp.pad(mask, ((0, Bp - B), (0, 0)))

    # Host-side weight plumbing (free): split the scorer's first layer at the
    # concat boundary, pre-transpose the width-1 second layers to lane vectors,
    # split the predict first layer into its three K=D blocks.
    aw1_set, aw1_ctx = aw["w1"][:D], aw["w1"][D:]
    aw2_t = jnp.transpose(aw["w2"])                 # (1, H)
    pw1a, pw1b, pw1c = pw["w1"][:D], pw["w1"][D:2 * D], pw["w1"][2 * D:]
    pw2_t = jnp.transpose(pw["w2"])                 # (1, 8)

    def batch3(i):
        return (i, 0, 0)

    def batch2(i):
        return (i, 0)

    def full2(i):
        return (0, 0)

    out = pl.pallas_call(
        _branch_kernel,
        out_shape=jax.ShapeDtypeStruct((Bp, 1), jnp.float32),
        grid_spec=pltpu.PrefetchScalarGridSpec(
            num_scalar_prefetch=0,
            grid=(Bp // tb,),
            in_specs=[
                pl.BlockSpec((tb, L, D), batch3),     # members/friends embeddings
                pl.BlockSpec((tb, D), batch2),        # ctx (item/user emb)
                pl.BlockSpec((tb, D), batch2),        # pure (graph emb)
                pl.BlockSpec((tb, D), batch2),        # item emb
                pl.BlockSpec((tb, L), batch2),        # mask
                pl.BlockSpec((D, H), full2),          # attention W1[:D]
                pl.BlockSpec((D, H), full2),          # attention W1[D:]
                pl.BlockSpec((1, H), full2),          # attention b1
                pl.BlockSpec((1, H), full2),          # attention W2^T
                pl.BlockSpec((1, 1), full2),          # attention b2
                pl.BlockSpec((D, 8), full2),          # predict W1 block a
                pl.BlockSpec((D, 8), full2),          # predict W1 block b
                pl.BlockSpec((D, 8), full2),          # predict W1 block c
                pl.BlockSpec((1, 8), full2),          # predict b1
                pl.BlockSpec((1, 8), full2),          # predict W2^T
                pl.BlockSpec((1, 1), full2),          # predict b2
            ],
            out_specs=pl.BlockSpec((tb, 1), batch2)),
        compiler_params=pltpu.CompilerParams(
            dimension_semantics=("parallel",),
            vmem_limit_bytes=_VMEM_LIMIT_BYTES),
    )(set_emb, ctx, pure, item, mask,
      aw1_set, aw1_ctx, aw["b1"], aw2_t, aw["b2"],
      pw1a, pw1b, pw1c, pw["b1"], pw2_t, pw["b2"])
    return out[:B] if Bp != B else out


# --------------------------------------------------------------------------
# DisRec forward (eval mode), built from the kernels above
# --------------------------------------------------------------------------
def disrec_forward(params, group_inputs, user_inputs, item_inputs,
                   friends, friends_mask, members, members_mask):
    """DisRec.forward (eval mode).

    The graph operators in `params` ("D", "A", "adj") are streamed in whatever
    dtype they already hold -- run precast_graph_operators(params) once at
    setup to get the bf16 (memory-bound) production path; embeddings and all
    accumulation stay f32."""
    layers = params["layers"]
    if group_inputs is not None and user_inputs is None:
        # ---- group branch (eval) ----
        user_embedding = jnp.concatenate([params["pref_user"], params["user_emb"]], axis=1)
        item_embedding = jnp.concatenate([params["pref_item"], params["item_emb"]], axis=1)
        item_emb = item_embedding[item_inputs]                              # (B, G)
        group_embedding = group_conv(params["D"], params["A"],
                                     params["group_emb"], layers)
        members_emb = user_embedding[members]                               # (B, L, G)
        g_pure = group_embedding[group_inputs]                              # (B, G)
        return fused_branch(members_emb, item_emb, g_pure, item_emb, members_mask,
                            params["attention2"], params["predict2"])
    else:
        # ---- user branch ----
        ui = jnp.concatenate([params["user_emb"], params["item_emb"]], axis=0)
        ui = hyper_conv(params["adj"], ui, layers)
        nu = params["user_emb"].shape[0]
        user_embedding, item_embedding = ui[:nu], ui[nu:]
        user_emb = user_embedding[user_inputs]                              # (B, U)
        item_emb = item_embedding[item_inputs]                              # (B, U)
        friends_emb = user_embedding[friends]                               # (B, L, U)
        return fused_branch(friends_emb, user_emb, user_emb, item_emb, friends_mask,
                            params["attention1"], params["predict1"])


# --------------------------------------------------------------------------
# Pure-JAX reference (for correctness check) -- original association (D@A)@emb
# --------------------------------------------------------------------------
def _ref_prop(M, emb, n_layers):
    acc, cur = emb, emb
    for _ in range(n_layers):
        cur = M @ cur
        acc = acc + cur
    return acc


def _ref_branch(set_emb, ctx, pure, item, mask, aw, pw):
    B, L, _ = set_emb.shape
    ctx_b = jnp.broadcast_to(ctx[:, None, :], (B, L, ctx.shape[-1]))
    x = jnp.concatenate([set_emb, ctx_b], axis=2).reshape(B * L, -1)
    h = jax.nn.relu(x @ aw["w1"] + aw["b1"])
    s = (h @ aw["w2"] + aw["b2"]).reshape(B, L)
    s = jnp.where(mask != 0.0, -jnp.inf, s)
    w = jax.nn.softmax(s, axis=1)
    att = jnp.einsum("bl,bld->bd", w, set_emb)
    comb = att + pure
    new = jnp.concatenate([comb * item, comb, item], axis=1)
    hh = jax.nn.relu(new @ pw["w1"] + pw["b1"])
    return jax.nn.sigmoid(hh @ pw["w2"] + pw["b2"])


def reference_forward(params, group_inputs, user_inputs, item_inputs,
                      friends, friends_mask, members, members_mask):
    layers = params["layers"]
    if group_inputs is not None and user_inputs is None:
        user_embedding = jnp.concatenate([params["pref_user"], params["user_emb"]], axis=1)
        item_embedding = jnp.concatenate([params["pref_item"], params["item_emb"]], axis=1)
        item_emb = item_embedding[item_inputs]
        DA = params["D"] @ params["A"]
        group_embedding = _ref_prop(DA, params["group_emb"], layers)
        members_emb = user_embedding[members]
        g_pure = group_embedding[group_inputs]
        return _ref_branch(members_emb, item_emb, g_pure, item_emb, members_mask,
                           params["attention2"], params["predict2"])
    else:
        ui = jnp.concatenate([params["user_emb"], params["item_emb"]], axis=0)
        ui = _ref_prop(params["adj"], ui, layers)
        nu = params["user_emb"].shape[0]
        user_embedding, item_embedding = ui[:nu], ui[nu:]
        user_emb = user_embedding[user_inputs]
        item_emb = item_embedding[item_inputs]
        friends_emb = user_embedding[friends]
        return _ref_branch(friends_emb, user_emb, user_emb, item_emb, friends_mask,
                           params["attention1"], params["predict1"])


# --------------------------------------------------------------------------
# Deterministic parameter init (synthetic, mirrors __init__ shapes)
# --------------------------------------------------------------------------
def _xavier(key, shape):
    bound = float(np.sqrt(6.0 / (shape[0] + shape[1])))
    return jax.random.uniform(key, shape, jnp.float32, -bound, bound)


def init_params(key, num_users, num_items, num_groups, u_emb, layers):
    g_emb = 2 * u_emb  # required by the forward-pass shape algebra
    ks = jax.random.split(key, 24)
    a1_h, a2_h = u_emb, g_emb  # AttentionLayer hidden = emb_dim // 2
    params = {
        "layers": layers,
        # PreferenceLayer embeddings (normal std=0.1)
        "pref_user": 0.1 * jax.random.normal(ks[0], (num_users, u_emb), jnp.float32),
        "pref_item": 0.1 * jax.random.normal(ks[1], (num_items, u_emb), jnp.float32),
        # DisRec embeddings (xavier)
        "user_emb": _xavier(ks[2], (num_users, u_emb)),
        "item_emb": _xavier(ks[3], (num_items, u_emb)),
        "group_emb": _xavier(ks[4], (num_groups, g_emb)),
        # graph operators
        "D": 0.1 * jax.random.normal(ks[5], (num_groups, num_groups), jnp.float32),
        "A": 0.1 * jax.random.normal(ks[6], (num_groups, num_groups), jnp.float32),
        "adj": 0.05 * jax.random.normal(ks[7], (num_users + num_items,
                                                num_users + num_items), jnp.float32),
        # AttentionLayer(2*u_emb): Linear(2U->U), Linear(U->1)
        "attention1": {"w1": _xavier(ks[8], (2 * u_emb, a1_h)),
                       "b1": 0.01 * jax.random.normal(ks[9], (1, a1_h), jnp.float32),
                       "w2": _xavier(ks[10], (a1_h, 1)),
                       "b2": 0.01 * jax.random.normal(ks[11], (1, 1), jnp.float32)},
        # AttentionLayer(2*g_emb): Linear(2G->G), Linear(G->1)
        "attention2": {"w1": _xavier(ks[12], (2 * g_emb, a2_h)),
                       "b1": 0.01 * jax.random.normal(ks[13], (1, a2_h), jnp.float32),
                       "w2": _xavier(ks[14], (a2_h, 1)),
                       "b2": 0.01 * jax.random.normal(ks[15], (1, 1), jnp.float32)},
        # PredictLayer(3*u_emb): Linear(3U->8), Linear(8->1)
        "predict1": {"w1": _xavier(ks[16], (3 * u_emb, 8)),
                     "b1": 0.01 * jax.random.normal(ks[17], (1, 8), jnp.float32),
                     "w2": _xavier(ks[18], (8, 1)),
                     "b2": 0.01 * jax.random.normal(ks[19], (1, 1), jnp.float32)},
        # PredictLayer(3*g_emb): Linear(3G->8), Linear(8->1)
        "predict2": {"w1": _xavier(ks[20], (3 * g_emb, 8)),
                     "b1": 0.01 * jax.random.normal(ks[21], (1, 8), jnp.float32),
                     "w2": _xavier(ks[22], (8, 1)),
                     "b2": 0.01 * jax.random.normal(ks[23], (1, 1), jnp.float32)},
    }
    return params


# --------------------------------------------------------------------------
if __name__ == "__main__":
    num_users, num_items, num_groups = 20, 24, 12
    u_emb, layers = 16, 2
    B, L = 4, 6

    key = jax.random.PRNGKey(0)
    pkey, ikey = jax.random.split(key)
    params = init_params(pkey, num_users, num_items, num_groups, u_emb, layers)
    # Production setting: the NxN operators are cast to bf16 ONCE here (hoisted
    # out of the per-forward path); everything else stays f32.
    params_bf16 = precast_graph_operators(params, jnp.bfloat16)

    kg, ki, ku, km, kf, kmm, kfm = jax.random.split(ikey, 7)
    group_inputs = jax.random.randint(kg, (B,), 0, num_groups)
    item_inputs = jax.random.randint(ki, (B,), 0, num_items)
    user_inputs = jax.random.randint(ku, (B,), 0, num_users)
    members = jax.random.randint(km, (B, L), 0, num_users)
    friends = jax.random.randint(kf, (B, L), 0, num_users)
    members_mask = (jax.random.uniform(kmm, (B, L)) > 0.6).astype(jnp.float32)
    members_mask = members_mask.at[:, 0].set(0.0)   # keep >=1 unmasked member per row
    friends_mask = (jax.random.uniform(kfm, (B, L)) > 0.6).astype(jnp.float32)
    friends_mask = friends_mask.at[:, 0].set(0.0)

    # ---- f32 propagation operands: tight check against the pure-JAX reference
    # (tolerance covers the D@(A@emb) reassociation and the EUP approx rcp) ----
    y_group = disrec_forward(params, group_inputs, None, item_inputs,
                             None, None, members, members_mask)
    y_user = disrec_forward(params, None, user_inputs, item_inputs,
                            friends, friends_mask, None, None)
    jax.block_until_ready((y_group, y_user))

    yg_ref = reference_forward(params, group_inputs, None, item_inputs,
                               None, None, members, members_mask)
    yu_ref = reference_forward(params, None, user_inputs, item_inputs,
                               friends, friends_mask, None, None)
    np.testing.assert_allclose(np.asarray(y_group), np.asarray(yg_ref),
                               rtol=5e-3, atol=5e-3)
    np.testing.assert_allclose(np.asarray(y_user), np.asarray(yu_ref),
                               rtol=5e-3, atol=5e-3)

    # ---- bf16 operator stream (default / production setting): loose check ----
    y_group_bf = disrec_forward(params_bf16, group_inputs, None, item_inputs,
                                None, None, members, members_mask)
    y_user_bf = disrec_forward(params_bf16, None, user_inputs, item_inputs,
                               friends, friends_mask, None, None)
    jax.block_until_ready((y_group_bf, y_user_bf))
    np.testing.assert_allclose(np.asarray(y_group_bf), np.asarray(yg_ref),
                               rtol=5e-2, atol=5e-2)
    np.testing.assert_allclose(np.asarray(y_user_bf), np.asarray(yu_ref),
                               rtol=5e-2, atol=5e-2)

    print("KERNEL_OK")
</pallas_src>

<mosaic_0001>
module attributes {stable_mosaic.version = 11 : i64} {
  func.func @_prop_matmul_kernel(%arg0: i32, %arg1: i32, %arg2: memref<12x12xf32, #tpu.memory_space<vmem>>, %arg3: memref<12x32xf32, #tpu.memory_space<vmem>>, %arg4: memref<12x32xf32, #tpu.memory_space<vmem>>) attributes {dimension_semantics = [#tpu.dimension_semantics<parallel>, #tpu.dimension_semantics<arbitrary>], iteration_bounds = array<i64: 1, 1>, scalar_prefetch = 0 : i64, scratch_operands = 0 : i64, tpu.core_type = #tpu.core_type<tc>, window_params = [{transform_indices = @transform_0, window_bounds = array<i64: 12, 12>}, {pipeline_mode = #tpu.pipeline_mode<synchronous>, transform_indices = @transform_1, window_bounds = array<i64: 12, 32>}, {transform_indices = @transform_2, window_bounds = array<i64: 12, 32>}]} {
    %c0_i32 = arith.constant 0 : i32
    %0 = arith.cmpi eq, %arg1, %c0_i32 : i32
    %1 = arith.extui %0 : i1 to i32
    %c0_i32_0 = arith.constant 0 : i32
    %2 = arith.cmpi ne, %1, %c0_i32_0 : i32
    scf.if %2 {
      %cst_7 = arith.constant 0.000000e+00 : f32
      %12 = vector.broadcast %cst_7 : f32 to vector<12x32xf32>
      %c0_8 = arith.constant 0 : index
      %c0_9 = arith.constant 0 : index
      %13 = vector.load %arg4[%c0_8, %c0_9] : memref<12x32xf32, #tpu.memory_space<vmem>>, vector<12x32xf32>
      tpu.vector_store %arg4[%c0_8, %c0_9], %12 {strides = array<i32>} : memref<12x32xf32, #tpu.memory_space<vmem>>, vector<12x32xf32>,
    } else {
    }
    %c12_i32 = arith.constant 12 : i32
    %3 = arith.muli %arg1, %c12_i32 : i32
    %4 = tpu.assume_multiple %3, 12 : i32
    %5 = arith.index_cast %4 : i32 to index
    %c0 = arith.constant 0 : index
    %6 = vector.load %arg3[%5, %c0] : memref<12x32xf32, #tpu.memory_space<vmem>>, vector<12x32xf32>
    %c0_1 = arith.constant 0 : index
    %c0_2 = arith.constant 0 : index
    %7 = vector.load %arg4[%c0_1, %c0_2] : memref<12x32xf32, #tpu.memory_space<vmem>>, vector<12x32xf32>
    %c0_3 = arith.constant 0 : index
    %c0_4 = arith.constant 0 : index
    %8 = vector.load %arg2[%c0_3, %c0_4] : memref<12x12xf32, #tpu.memory_space<vmem>>, vector<12x12xf32>
    %cst = arith.constant dense<0.000000e+00> : vector<12x32xf32>
    %9 = tpu.matmul %8, %6, %cst {dimension_numbers = #tpu.dot_dimension_numbers<[1], [0], [0], [1], [0, 0, 1, 1], [], []>} : vector<12x12xf32>, vector<12x32xf32>, vector<12x32xf32> -> vector<12x32xf32>
    %10 = arith.addf %7, %9 : vector<12x32xf32>
    %c0_5 = arith.constant 0 : index
    %c0_6 = arith.constant 0 : index
    %11 = vector.load %arg4[%c0_5, %c0_6] : memref<12x32xf32, #tpu.memory_space<vmem>>, vector<12x32xf32>
    tpu.vector_store %arg4[%c0_5, %c0_6], %10 {strides = array<i32>} : memref<12x32xf32, #tpu.memory_space<vmem>>, vector<12x32xf32>,
    return
  }
  func.func @transform_0(%arg0: i32, %arg1: i32) -> (i32, i32) {
    %c0_i32 = arith.constant 0 : i32
    return %arg0, %arg1 : i32, i32
  }
  func.func @transform_1(%arg0: i32, %arg1: i32) -> (i32, i32) {
    %c0_i32 = arith.constant 0 : i32
    %c0_i32_0 = arith.constant 0 : i32
    %c0_i32_1 = arith.constant 0 : i32
    return %c0_i32, %c0_i32_0 : i32, i32
  }
  func.func @transform_2(%arg0: i32, %arg1: i32) -> (i32, i32) {
    %c0_i32 = arith.constant 0 : i32
    %c0_i32_0 = arith.constant 0 : i32
    return %arg0, %c0_i32 : i32, i32
  }
}

</mosaic_0001>

<llo_original>
// kernel: tpu_custom_call.1
$region0: #{tpu_custom_call.1}
  #allocation0 [shape = 'u32[]', space=smem, size = 0x4, offset = 0x4, fixed_abs, tag = 'smem constant byte address 0x4 - core index']
  #allocation1 [shape = 'u32[144,128]{1,0:T(1,128)}', space=vmem, size = 0x12000, scoped, tag = 'internal scratch']
  %s0 = inlined_call_operand.hbm [shape: f32[12,12], index: 0, kind: input, shape index: {}]
  %s1 = inlined_call_operand.hbm [shape: f32[12,32], index: 1, kind: input, shape index: {}]
  %s2 = inlined_call_operand.hbm [shape: f32[12,32], index: 2, kind: output, shape index: {}]
  %s3 = sld [smem:[#allocation0]]
  $region30: #{tpu_custom_call.1} parent=0
    _
  %s5 = ssub.s32 1, %s3
  %s6 = scalar_select 0, %s5, %s3
  $region1: #{tpu_custom_call.1} parent=0
    #allocation2 [shape = 'u8[8192]{0}', space=vmem, size = 0x2000, scoped, tag = 'input window, operand 0, single buffered']
    #allocation3 [shape = 's32[1]{0}', space=sflag, size = 0x4, scoped, tag = 'scoped memory for tpu_custom_call.1']
    #allocation4 [shape = 's32[1]{0}', space=sflag, size = 0x4, scoped, tag = 'scoped memory for tpu_custom_call.1']
    #allocation5 [shape = 'u8[8192]{0}', space=vmem, size = 0x2000, scoped, tag = 'input window, operand 1, single buffered']
    #allocation6 [shape = 's32[1]{0}', space=sflag, size = 0x4, scoped, tag = 'scoped memory for tpu_custom_call.1']
    #allocation7 [shape = 'u8[8192]{0}', space=vmem, size = 0x2000, scoped, tag = 'output window, operand 0, single buffered']
    %7 = vsyncpa [#allocation3], 0
    %8 = vsyncpa [#allocation6], 0
    %9 = vsyncpa [#allocation4], 0
    // Predicated region
    $region2: #{tpu_custom_call.1} parent=1 // pred_check
      _
    $region3: #{tpu_custom_call.1} parent=1 // pred_check_branch
      %11 = sbr.rel (0) target = $region5
    $region4: #{tpu_custom_call.1} parent=1 // pred_region
      %s13 = ssub.s32 256, 256
      %14 = vsyncadd [#allocation3], %s13
      %s15 = sshll.u32 [#allocation2], 4
      %s16 = int_to_ptr.vmem [resolvable:$true] %s15
      %21 = dma.hbm_to_vmem [thread:$0]  %s0, 256, %s16, [#allocation3], 128, 128, 8
    $region5: #{tpu_custom_call.1} parent=1 // pred_fallthru
      _
    // Predicated region
    $region6: #{tpu_custom_call.1} parent=1 // pred_check
      _
    $region7: #{tpu_custom_call.1} parent=1 // pred_check_branch
      %23 = sbr.rel (0) target = $region9
    $region8: #{tpu_custom_call.1} parent=1 // pred_region
      %s25 = ssub.s32 256, 256
      %26 = vsyncadd [#allocation6], %s25
      %s27 = sshll.u32 [#allocation5], 4
      %s28 = int_to_ptr.vmem [resolvable:$true] %s27
      %33 = dma.hbm_to_vmem [thread:$0]  %s1, 256, %s28, [#allocation6], 128, 128, 8
    $region9: #{tpu_custom_call.1} parent=1 // pred_fallthru
      _
    // Predicated region
    $region10: #{tpu_custom_call.1} parent=1 // pred_check
      _
    $region11: #{tpu_custom_call.1} parent=1 // pred_check_branch
      %35 = sbr.rel (0) target = $region13
    $region12: #{tpu_custom_call.1} parent=1 // pred_region
      %36 = dma.done [#allocation3], 256
    $region13: #{tpu_custom_call.1} parent=1 // pred_fallthru
      _
    // Predicated region
    $region14: #{tpu_custom_call.1} parent=1 // pred_check
      _
    $region15: #{tpu_custom_call.1} parent=1 // pred_check_branch
      %38 = sbr.rel (0) target = $region17
    $region16: #{tpu_custom_call.1} parent=1 // pred_region
      %39 = dma.done [#allocation6], 256
    $region17: #{tpu_custom_call.1} parent=1 // pred_fallthru
      _
    %p40 = scmp.eq.s32.totalorder 0, 0
    // Predicated region
    $region18: #{tpu_custom_call.1} parent=1 // pred_check
      %p41 = pneg %p40
    $region19: #{tpu_custom_call.1} parent=1 // pred_check_branch
      %43 = sbr.rel (%p41) target = $region21
    $region20: #{tpu_custom_call.1} parent=1 // pred_region
      %vm44 = vcmask 261120
      %45 = vst.msk [vmem:[#allocation7] sm:$0xff] %vm44, 0.0
      %vm46 = vcmask 257024
      %47 = vst.msk [vmem:[#allocation7 + $0x8] sm:$0xf] %vm46, 0.0
    $region21: #{tpu_custom_call.1} parent=1 // pred_fallthru
      _
    %s48 = smul.u32 0, 12
    %s49 = scalar_lea.vmem [#allocation5], %s48
    %v50 = vld [vmem:[%s49] sm:$0xff]
    %v51 = vld [vmem:[%s49 + $0x8] sm:$0xf]
    %v52 = vld [vmem:[#allocation7] sm:$0xff]
    %v53 = vld [vmem:[#allocation7 + $0x8] sm:$0xf]
    %v54 = vld [vmem:[#allocation2] sm:$0xff]
    %v55 = vld [vmem:[#allocation2 + $0x8] sm:$0xf]
    %vm56 = vcmask 97280
    %v58 = vsel %vm56, %v54, 0
    %v61 = vsel %vm56, %v55, 0
    %vm63 = vcmask 1043456
    %v65 = vsel %vm63, %v51, 0
    %67 = vmatprep.subr.mxu0 0.0
    %68 = vmatpush1.msra.mxu0 %v50
    %69 = vmatprep.subr.mxu0 0.0
    %70 = vmatpush1.msra.mxu0 %v65
    %71 = vmatprep.subr.mxu0 0.0
    %72 = vmatpush1.msra.mxu0 0.0
    %73 = vmatprep.subr.mxu0 0.0
    %74 = vmatpush1.msra.mxu0 0.0
    %75 = vmatprep.subr.mxu0 0.0
    %76 = vmatpush1.msra.mxu0 0.0
    %77 = vmatprep.subr.mxu0 0.0
    %78 = vmatpush1.msra.mxu0 0.0
    %79 = vmatprep.subr.mxu0 0.0
    %80 = vmatpush1.msra.mxu0 0.0
    %81 = vmatprep.subr.mxu0 0.0
    %82 = vmatpush1.msra.mxu0 0.0
    %83 = vmatprep.subr.mxu0 0.0
    %84 = vmatpush1.msra.mxu0 0.0
    %85 = vmatprep.subr.mxu0 0.0
    %86 = vmatpush1.msra.mxu0 0.0
    %87 = vmatprep.subr.mxu0 0.0
    %88 = vmatpush1.msra.mxu0 0.0
    %89 = vmatprep.subr.mxu0 0.0
    %90 = vmatpush1.msra.mxu0 0.0
    %91 = vmatprep.subr.mxu0 0.0
    %92 = vmatpush1.msra.mxu0 0.0
    %93 = vmatprep.subr.mxu0 0.0
    %94 = vmatpush1.msra.mxu0 0.0
    %95 = vmatprep.subr.mxu0 0.0
    %96 = vmatpush1.msra.mxu0 0.0
    %97 = vmatprep.subr.mxu0 0.0
    %98 = vmatpush1.msra.mxu0 0.0
    %99 = vmatprep.subr.mxu0 0.0
    %100 = vmatpush1.msra.mxu0 0.0
    %101 = vmatprep.subr.mxu0 0.0
    %102 = vmatpush1.msra.mxu0 0.0
    %103 = vmatprep.subr.mxu0 0.0
    %104 = vmatpush1.msra.mxu0 0.0
    %105 = vmatprep.subr.mxu0 0.0
    %106 = vmatpush1.msra.mxu0 0.0
    %107 = vmatprep.subr.mxu0 0.0
    %108 = vmatpush1.msra.mxu0 0.0
    %109 = vmatprep.subr.mxu0 0.0
    %110 = vmatpush1.msra.mxu0 0.0
    %111 = vmatprep.subr.mxu0 0.0
    %112 = vmatpush1.msra.mxu0 0.0
    %113 = vmatprep.subr.mxu0 0.0
    %114 = vmatpush1.msra.mxu0 0.0
    %115 = vmatprep.subr.mxu0 0.0
    %116 = vmatpush1.msra.mxu0 0.0
    %117 = vmatprep.subr.mxu0 0.0
    %118 = vmatpush1.msra.mxu0 0.0
    %119 = vmatprep.subr.mxu0 0.0
    %120 = vmatpush1.msra.mxu0 0.0
    %121 = vmatprep.subr.mxu0 0.0
    %122 = vmatpush1.msra.mxu0 0.0
    %123 = vmatprep.subr.mxu0 0.0
    %124 = vmatpush1.msra.mxu0 0.0
    %125 = vmatprep.subr.mxu0 0.0
    %126 = vmatpush1.msra.mxu0 0.0
    %127 = vmatprep.subr.mxu0 0.0
    %128 = vmatpush1.msra.mxu0 0.0
    %129 = vmatprep.subr.mxu0 0.0
    %130 = vmatpush1.msra.mxu0 0.0
    %131 = vmatprep.mubr.f32.mxu0 0.0
    %132 = vmatmul.mubr.f32.gmra.mrb[0].mxu0 %v58
    %v133 = vpop.f32.mrb[0].mxu0
    %v134 = vadd.f32 0.0, %v133
    %v135 = vpop.f32.mrb[0].mxu0
    %136 = vmatprep.mubr.f32.mxu0 0.0
    %137 = vmatmul.mubr.f32.gmra.mrb[0].mxu0 %v61
    %v138 = vpop.f32.mrb[0].mxu0
    %v139 = vadd.f32 0.0, %v138
    %v140 = vpop.f32.mrb[0].mxu0
    %141 = vdwg.mxu0
    %v142 = vadd.f32 %v52, %v134
    %v143 = vadd.f32 %v53, %v139
    %vm144 = vcmask 261120
    %145 = vst.msk [vmem:[#allocation7] sm:$0xff] %vm144, %v142
    %vm146 = vcmask 257024
    %147 = vst.msk [vmem:[#allocation7 + $0x8] sm:$0xf] %vm146, %v143
    // Predicated region
    $region22: #{tpu_custom_call.1} parent=1 // pred_check
      _
    $region23: #{tpu_custom_call.1} parent=1 // pred_check_branch
      %149 = sbr.rel (0) target = $region25
    $region24: #{tpu_custom_call.1} parent=1 // pred_region
      %s151 = ssub.s32 256, 256
      %152 = vsyncadd [#allocation4], %s151
      %s153 = sshll.u32 [#allocation7], 4
      %s154 = int_to_ptr.vmem [resolvable:$true] %s153
      %159 = dma.vmem_to_hbm [thread:$0]  %s154, 256, %s2, [#allocation4], 128, 128, 8
    $region25: #{tpu_custom_call.1} parent=1 // pred_fallthru
      _
    // Predicated region
    $region26: #{tpu_custom_call.1} parent=1 // pred_check
      _
    $region27: #{tpu_custom_call.1} parent=1 // pred_check_branch
      %161 = sbr.rel (0) target = $region29
    $region28: #{tpu_custom_call.1} parent=1 // pred_region
      %162 = dma.done [#allocation4], 256
    $region29: #{tpu_custom_call.1} parent=1 // pred_fallthru
      _
    %163 = vsyncpa [#allocation3], 1
    %164 = vsyncpa [#allocation6], 1
    %165 = vsyncpa [#allocation4], 1

</llo_original>
